<compile_context>
chip_gen: v6e
topology: v6e:2x2x1
jax: 0.10.0
libtpu: 0.0.40
codegen_flags: <defaults>
</compile_context>

<pallas_src>
import jax
import jax.numpy as jnp
from jax.experimental import pallas as pl
from jax.experimental.pallas import tpu as pltpu


def _round_up(x, n):
    return ((x + n - 1) // n) * n


def _ffn_kernel(x_ref, w1_ref, b1_ref, w2_ref, b2_ref, o_ref, acc_ref):
    # x_ref:  (tm, E)    w1_ref: (E, tf)   b1_ref: (1, tf)
    # w2_ref: (tf, E)    b2_ref: (1, E)    o_ref:  (tm, E)   acc_ref: (tm, E) f32
    # grid = (M/tm, F/tf); axis 1 (ff) is the reduction axis (innermost).
    j = pl.program_id(1)

    @pl.when(j == 0)
    def _init():
        acc_ref[...] = jnp.zeros_like(acc_ref)

    # First matmul + bias + ReLU on this ff tile (f32 path).
    h = jnp.dot(x_ref[...], w1_ref[...], preferred_element_type=jnp.float32)
    h = jnp.maximum(h + b1_ref[...].astype(jnp.float32), 0.0)

    # Second matmul: partial contribution into the f32 accumulator.
    acc_ref[...] += jnp.dot(h.astype(w2_ref.dtype), w2_ref[...],
                            preferred_element_type=jnp.float32)

    @pl.when(j == pl.num_programs(1) - 1)
    def _finalize():
        # b2 is added exactly once, in the finalize step.
        o_ref[...] = (acc_ref[...] + b2_ref[...].astype(jnp.float32)).astype(o_ref.dtype)


def feed_forward(x, w1, b1, w2, b2, *, tm=256, tf=512):
    """x: (..., emb) -> (..., emb). Equivalent to Linear->ReLU->Linear with
    weights stored as (in_dim, out_dim) (transposed vs. PyTorch storage)."""
    orig_shape = x.shape
    emb = orig_shape[-1]
    ff = w1.shape[1]
    assert w1.shape == (emb, ff) and w2.shape == (ff, emb)
    assert b1.shape == (ff,) and b2.shape == (emb,)

    m = 1
    for d in orig_shape[:-1]:
        m *= d
    x2d = x.reshape(m, emb)

    # Tile sizes aligned to vreg geometry: rows multiple of 8, lanes multiple of 128.
    tm = min(tm, _round_up(m, 8))
    tf = min(tf, _round_up(ff, 128))
    m_pad = _round_up(m, tm)
    e_pad = _round_up(emb, 128)
    f_pad = _round_up(ff, tf)

    def pad2(a, rows, cols):
        pr, pc = rows - a.shape[0], cols - a.shape[1]
        if pr or pc:
            a = jnp.pad(a, ((0, pr), (0, pc)))
        return a

    xp = pad2(x2d, m_pad, e_pad)
    w1p = pad2(w1, e_pad, f_pad)
    w2p = pad2(w2, f_pad, e_pad)
    b1p = pad2(b1.reshape(1, ff), 1, f_pad)
    b2p = pad2(b2.reshape(1, emb), 1, e_pad)

    grid = (m_pad // tm, f_pad // tf)

    itemsize = jnp.dtype(x.dtype).itemsize
    cost = pl.CostEstimate(
        flops=2 * m * emb * ff * 2,        # two matmuls
        transcendentals=0,
        bytes_accessed=itemsize * (2 * m * emb + 2 * emb * ff + ff + emb),
    )

    out = pl.pallas_call(
        _ffn_kernel,
        out_shape=jax.ShapeDtypeStruct((m_pad, e_pad), x.dtype),
        grid=grid,
        in_specs=[
            pl.BlockSpec((tm, e_pad), lambda i, j: (i, 0)),   # x: streams over rows
            pl.BlockSpec((e_pad, tf), lambda i, j: (0, j)),   # w1: only depends on ff tile
            pl.BlockSpec((1, tf),     lambda i, j: (0, j)),   # b1
            pl.BlockSpec((tf, e_pad), lambda i, j: (j, 0)),   # w2: only depends on ff tile
            pl.BlockSpec((1, e_pad),  lambda i, j: (0, 0)),   # b2 (used in finalize only)
        ],
        out_specs=pl.BlockSpec((tm, e_pad), lambda i, j: (i, 0)),
        scratch_shapes=[pltpu.VMEM((tm, e_pad), jnp.float32)],
        compiler_params=pltpu.CompilerParams(
            dimension_semantics=("parallel", "arbitrary"),
            vmem_limit_bytes=64 * 1024 * 1024,
        ),
        cost_estimate=cost,
    )(xp, w1p, b1p, w2p, b2p)

    return out[:m, :emb].reshape(orig_shape)


def init_params(key, emb_dim, ff_dim, dtype=jnp.float32):
    """PyTorch nn.Linear-style init: U(-1/sqrt(fan_in), 1/sqrt(fan_in)),
    with weights stored transposed as (in_dim, out_dim)."""
    k1, k2, k3, k4 = jax.random.split(key, 4)
    bound1 = 1.0 / (emb_dim ** 0.5)
    bound2 = 1.0 / (ff_dim ** 0.5)
    w1 = jax.random.uniform(k1, (emb_dim, ff_dim), dtype, -bound1, bound1)
    b1 = jax.random.uniform(k2, (ff_dim,), dtype, -bound1, bound1)
    w2 = jax.random.uniform(k3, (ff_dim, emb_dim), dtype, -bound2, bound2)
    b2 = jax.random.uniform(k4, (emb_dim,), dtype, -bound2, bound2)
    return w1, b1, w2, b2


def _reference(x, w1, b1, w2, b2):
    return jnp.maximum(x @ w1 + b1, 0.0) @ w2 + b2


if __name__ == "__main__":
    key = jax.random.PRNGKey(0)

    # Case 1: aligned shapes, default tiles (single reduction step).
    batch, seq, emb_dim, ff_dim = 2, 8, 128, 256
    kx, kp, key = jax.random.split(key, 3)
    x = jax.random.normal(kx, (batch, seq, emb_dim), jnp.float32)
    w1, b1, w2, b2 = init_params(kp, emb_dim, ff_dim)
    y = jax.block_until_ready(feed_forward(x, w1, b1, w2, b2))
    ref = _reference(x, w1, b1, w2, b2)
    assert y.shape == x.shape
    assert jnp.allclose(y, ref, atol=1e-4, rtol=1e-4)

    # Case 2: unaligned shapes + small tiles -> exercises padding, row tiling,
    # and the multi-step ff reduction / accumulator path.
    batch2, seq2, emb2, ff2 = 2, 5, 96, 200
    kx2, kp2 = jax.random.split(key)
    x2 = jax.random.normal(kx2, (batch2, seq2, emb2), jnp.float32)
    p2 = init_params(kp2, emb2, ff2)
    y2 = jax.block_until_ready(feed_forward(x2, *p2, tm=8, tf=128))
    ref2 = _reference(x2, *p2)
    assert y2.shape == x2.shape
    assert jnp.allclose(y2, ref2, atol=1e-4, rtol=1e-4)

    print("KERNEL_OK")
</pallas_src>

<mosaic_0001>
module attributes {stable_mosaic.version = 11 : i64} {
  func.func @_ffn_kernel(%arg0: i32, %arg1: i32, %arg2: memref<16x128xf32, #tpu.memory_space<vmem>>, %arg3: memref<128x256xf32, #tpu.memory_space<vmem>>, %arg4: memref<1x256xf32, #tpu.memory_space<vmem>>, %arg5: memref<256x128xf32, #tpu.memory_space<vmem>>, %arg6: memref<1x128xf32, #tpu.memory_space<vmem>>, %arg7: memref<16x128xf32, #tpu.memory_space<vmem>>, %arg8: memref<16x128xf32, #tpu.memory_space<vmem>>) attributes {dimension_semantics = [#tpu.dimension_semantics<parallel>, #tpu.dimension_semantics<arbitrary>], iteration_bounds = array<i64: 1, 1>, scalar_prefetch = 0 : i64, scratch_operands = 1 : i64, tpu.core_type = #tpu.core_type<tc>, window_params = [{transform_indices = @transform_0, window_bounds = array<i64: 16, 128>}, {transform_indices = @transform_1, window_bounds = array<i64: 128, 256>}, {transform_indices = @transform_2, window_bounds = array<i64: 1, 256>}, {transform_indices = @transform_3, window_bounds = array<i64: 256, 128>}, {pipeline_mode = #tpu.pipeline_mode<synchronous>, transform_indices = @transform_4, window_bounds = array<i64: 1, 128>}, {transform_indices = @transform_5, window_bounds = array<i64: 16, 128>}]} {
    %c0_i32 = arith.constant 0 : i32
    %0 = arith.cmpi eq, %arg1, %c0_i32 : i32
    %1 = arith.extui %0 : i1 to i32
    %c0_i32_0 = arith.constant 0 : i32
    %2 = arith.cmpi ne, %1, %c0_i32_0 : i32
    scf.if %2 {
      %cst_16 = arith.constant 0.000000e+00 : f32
      %19 = vector.broadcast %cst_16 : f32 to vector<16x128xf32>
      %c0_17 = arith.constant 0 : index
      %c0_18 = arith.constant 0 : index
      %20 = vector.load %arg8[%c0_17, %c0_18] : memref<16x128xf32, #tpu.memory_space<vmem>>, vector<16x128xf32>
      tpu.vector_store %arg8[%c0_17, %c0_18], %19 {strides = array<i32>} : memref<16x128xf32, #tpu.memory_space<vmem>>, vector<16x128xf32>,
    } else {
    }
    %c0 = arith.constant 0 : index
    %c0_1 = arith.constant 0 : index
    %3 = vector.load %arg2[%c0, %c0_1] : memref<16x128xf32, #tpu.memory_space<vmem>>, vector<16x128xf32>
    %c0_2 = arith.constant 0 : index
    %c0_3 = arith.constant 0 : index
    %4 = vector.load %arg3[%c0_2, %c0_3] : memref<128x256xf32, #tpu.memory_space<vmem>>, vector<128x256xf32>
    %cst = arith.constant dense<0.000000e+00> : vector<16x256xf32>
    %5 = tpu.matmul %3, %4, %cst {dimension_numbers = #tpu.dot_dimension_numbers<[1], [0], [0], [1], [0, 0, 1, 1], [], []>} : vector<16x128xf32>, vector<128x256xf32>, vector<16x256xf32> -> vector<16x256xf32>
    %c0_4 = arith.constant 0 : index
    %c0_5 = arith.constant 0 : index
    %6 = vector.load %arg4[%c0_4, %c0_5] : memref<1x256xf32, #tpu.memory_space<vmem>>, vector<1x256xf32>
    %7 = vector.broadcast %6 : vector<1x256xf32> to vector<16x256xf32>
    %8 = arith.addf %5, %7 : vector<16x256xf32>
    %cst_6 = arith.constant 0.000000e+00 : f32
    %9 = vector.broadcast %cst_6 : f32 to vector<16x256xf32>
    %10 = arith.maximumf %8, %9 : vector<16x256xf32>
    %c0_7 = arith.constant 0 : index
    %c0_8 = arith.constant 0 : index
    %11 = vector.load %arg8[%c0_7, %c0_8] : memref<16x128xf32, #tpu.memory_space<vmem>>, vector<16x128xf32>
    %c0_9 = arith.constant 0 : index
    %c0_10 = arith.constant 0 : index
    %12 = vector.load %arg5[%c0_9, %c0_10] : memref<256x128xf32, #tpu.memory_space<vmem>>, vector<256x128xf32>
    %cst_11 = arith.constant dense<0.000000e+00> : vector<16x128xf32>
    %13 = tpu.matmul %10, %12, %cst_11 {dimension_numbers = #tpu.dot_dimension_numbers<[1], [0], [0], [1], [0, 0, 1, 1], [], []>} : vector<16x256xf32>, vector<256x128xf32>, vector<16x128xf32> -> vector<16x128xf32>
    %14 = arith.addf %11, %13 : vector<16x128xf32>
    %c0_12 = arith.constant 0 : index
    %c0_13 = arith.constant 0 : index
    %15 = vector.load %arg8[%c0_12, %c0_13] : memref<16x128xf32, #tpu.memory_space<vmem>>, vector<16x128xf32>
    tpu.vector_store %arg8[%c0_12, %c0_13], %14 {strides = array<i32>} : memref<16x128xf32, #tpu.memory_space<vmem>>, vector<16x128xf32>,
    %c0_i32_14 = arith.constant 0 : i32
    %16 = arith.cmpi eq, %arg1, %c0_i32_14 : i32
    %17 = arith.extui %16 : i1 to i32
    %c0_i32_15 = arith.constant 0 : i32
    %18 = arith.cmpi ne, %17, %c0_i32_15 : i32
    scf.if %18 {
      %c0_16 = arith.constant 0 : index
      %c0_17 = arith.constant 0 : index
      %19 = vector.load %arg8[%c0_16, %c0_17] : memref<16x128xf32, #tpu.memory_space<vmem>>, vector<16x128xf32>
      %c0_18 = arith.constant 0 : index
      %c0_19 = arith.constant 0 : index
      %20 = vector.load %arg6[%c0_18, %c0_19] : memref<1x128xf32, #tpu.memory_space<vmem>>, vector<1x128xf32>
      %21 = vector.broadcast %20 : vector<1x128xf32> to vector<16x128xf32>
      %22 = arith.addf %19, %21 : vector<16x128xf32>
      %c0_20 = arith.constant 0 : index
      %c0_21 = arith.constant 0 : index
      %23 = vector.load %arg7[%c0_20, %c0_21] : memref<16x128xf32, #tpu.memory_space<vmem>>, vector<16x128xf32>
      tpu.vector_store %arg7[%c0_20, %c0_21], %22 {strides = array<i32>} : memref<16x128xf32, #tpu.memory_space<vmem>>, vector<16x128xf32>,
    } else {
    }
    return
  }
  func.func @transform_0(%arg0: i32, %arg1: i32) -> (i32, i32) {
    %c0_i32 = arith.constant 0 : i32
    %c0_i32_0 = arith.constant 0 : i32
    return %arg0, %c0_i32 : i32, i32
  }
  func.func @transform_1(%arg0: i32, %arg1: i32) -> (i32, i32) {
    %c0_i32 = arith.constant 0 : i32
    %c0_i32_0 = arith.constant 0 : i32
    return %c0_i32, %arg1 : i32, i32
  }
  func.func @transform_2(%arg0: i32, %arg1: i32) -> (i32, i32) {
    %c0_i32 = arith.constant 0 : i32
    %c0_i32_0 = arith.constant 0 : i32
    return %c0_i32, %arg1 : i32, i32
  }
  func.func @transform_3(%arg0: i32, %arg1: i32) -> (i32, i32) {
    %c0_i32 = arith.constant 0 : i32
    %c0_i32_0 = arith.constant 0 : i32
    return %arg1, %c0_i32 : i32, i32
  }
  func.func @transform_4(%arg0: i32, %arg1: i32) -> (i32, i32) {
    %c0_i32 = arith.constant 0 : i32
    %c0_i32_0 = arith.constant 0 : i32
    %c0_i32_1 = arith.constant 0 : i32
    return %c0_i32, %c0_i32_0 : i32, i32
  }
  func.func @transform_5(%arg0: i32, %arg1: i32) -> (i32, i32) {
    %c0_i32 = arith.constant 0 : i32
    %c0_i32_0 = arith.constant 0 : i32
    return %arg0, %c0_i32 : i32, i32
  }
}

</mosaic_0001>

<llo_original>
// kernel: tpu_custom_call.1
$region0: #{tpu_custom_call.1}
  #allocation0 [shape = 'u32[]', space=smem, size = 0x4, offset = 0x4, fixed_abs, tag = 'smem constant byte address 0x4 - core index']
  #allocation1 [shape = 'u32[144,128]{1,0:T(1,128)}', space=vmem, size = 0x12000, scoped, tag = 'internal scratch']
  #allocation2 [shape = 'f32[16,128]{1,0:T(8,128)}', space=vmem, size = 0x2000, scoped, tag = 'scratch operand']
  %s0 = inlined_call_operand.hbm [shape: f32[16,128], index: 0, kind: input, shape index: {}]
  %s1 = inlined_call_operand.hbm [shape: f32[128,256], index: 1, kind: input, shape index: {}]
  %s2 = inlined_call_operand.vmem [shape: f32[1,256], index: 2, kind: input, shape index: {}]
  %s3 = inlined_call_operand.hbm [shape: f32[256,128], index: 3, kind: input, shape index: {}]
  %s4 = inlined_call_operand.vmem [shape: f32[1,128], index: 4, kind: input, shape index: {}]
  %s5 = inlined_call_operand.hbm [shape: f32[16,128], index: 5, kind: output, shape index: {}]
  %s6 = sld [smem:[#allocation0]]
  $region50: #{tpu_custom_call.1} parent=0
    _
  %s8 = ssub.s32 1, %s6
  %s9 = scalar_select 0, %s8, %s6
  $region1: #{tpu_custom_call.1} parent=0
    #allocation3 [shape = 'u8[8192]{0}', space=vmem, size = 0x2000, scoped, tag = 'input window, operand 0, single buffered']
    #allocation4 [shape = 's32[1]{0}', space=sflag, size = 0x4, scoped, tag = 'scoped memory for tpu_custom_call.1']
    #allocation5 [shape = 's32[1]{0}', space=sflag, size = 0x4, scoped, tag = 'scoped memory for tpu_custom_call.1']
    #allocation6 [shape = 'u8[131072]{0}', space=vmem, size = 0x20000, scoped, tag = 'input window, operand 1, single buffered']
    #allocation7 [shape = 's32[1]{0}', space=sflag, size = 0x4, scoped, tag = 'scoped memory for tpu_custom_call.1']
    #allocation8 [shape = 'u8[131072]{0}', space=vmem, size = 0x20000, scoped, tag = 'input window, operand 3, single buffered']
    #allocation9 [shape = 'u8[8192]{0}', space=vmem, size = 0x2000, scoped, tag = 'output window, operand 0, single buffered']
    %10 = vsyncpa [#allocation4], 0
    %11 = vsyncpa [#allocation7], 0
    %12 = vsyncpa [#allocation5], 0
    // Predicated region
    $region2: #{tpu_custom_call.1} parent=1 // pred_check
      _
    $region3: #{tpu_custom_call.1} parent=1 // pred_check_branch
      %14 = sbr.rel (0) target = $region5
    $region4: #{tpu_custom_call.1} parent=1 // pred_region
      %s16 = ssub.s32 256, 256
      %17 = vsyncadd [#allocation4], %s16
      %s18 = sshll.u32 [#allocation3], 4
      %s19 = int_to_ptr.vmem [resolvable:$true] %s18
      %24 = dma.hbm_to_vmem [thread:$0]  %s0, 256, %s19, [#allocation4], 128, 128, 8
    $region5: #{tpu_custom_call.1} parent=1 // pred_fallthru
      _
    // Predicated region
    $region6: #{tpu_custom_call.1} parent=1 // pred_check
      _
    $region7: #{tpu_custom_call.1} parent=1 // pred_check_branch
      %26 = sbr.rel (0) target = $region9
    $region8: #{tpu_custom_call.1} parent=1 // pred_region
      %s28 = ssub.s32 4096, 4096
      %29 = vsyncadd [#allocation7], %s28
      %s30 = sshll.u32 [#allocation6], 4
      %s31 = int_to_ptr.vmem [resolvable:$true] %s30
      %36 = dma.hbm_to_vmem [thread:$0]  %s1, 4096, %s31, [#allocation7], 256, 256, 16
    $region9: #{tpu_custom_call.1} parent=1 // pred_fallthru
      _
    // Predicated region
    $region10: #{tpu_custom_call.1} parent=1 // pred_check
      _
    $region11: #{tpu_custom_call.1} parent=1 // pred_check_branch
      %38 = sbr.rel (0) target = $region13
    $region12: #{tpu_custom_call.1} parent=1 // pred_region
      _
    $region13: #{tpu_custom_call.1} parent=1 // pred_fallthru
      _
    // Predicated region
    $region14: #{tpu_custom_call.1} parent=1 // pred_check
      _
    $region15: #{tpu_custom_call.1} parent=1 // pred_check_branch
      %40 = sbr.rel (0) target = $region17
    $region16: #{tpu_custom_call.1} parent=1 // pred_region
      %s42 = ssub.s32 4096, 4096
      %43 = vsyncadd [#allocation7], %s42
      %s44 = sshll.u32 [#allocation8], 4
      %s45 = int_to_ptr.vmem [resolvable:$true] %s44
      %50 = dma.hbm_to_vmem [thread:$0]  %s3, 4096, %s45, [#allocation7], 128, 128, 8
    $region17: #{tpu_custom_call.1} parent=1 // pred_fallthru
      _
    // Predicated region
    $region18: #{tpu_custom_call.1} parent=1 // pred_check
      _
    $region19: #{tpu_custom_call.1} parent=1 // pred_check_branch
      %52 = sbr.rel (0) target = $region21
    $region20: #{tpu_custom_call.1} parent=1 // pred_region
      _
    $region21: #{tpu_custom_call.1} parent=1 // pred_fallthru
      _
    // Predicated region
    $region22: #{tpu_custom_call.1} parent=1 // pred_check
      _
    $region23: #{tpu_custom_call.1} parent=1 // pred_check_branch
      %54 = sbr.rel (0) target = $region25
    $region24: #{tpu_custom_call.1} parent=1 // pred_region
      %55 = dma.done [#allocation4], 256
    $region25: #{tpu_custom_call.1} parent=1 // pred_fallthru
      _
    // Predicated region
    $region26: #{tpu_custom_call.1} parent=1 // pred_check
      _
    $region27: #{tpu_custom_call.1} parent=1 // pred_check_branch
      %57 = sbr.rel (0) target = $region29
    $region28: #{tpu_custom_call.1} parent=1 // pred_region
      %58 = dma.done [#allocation7], 4096
    $region29: #{tpu_custom_call.1} parent=1 // pred_fallthru
      _
    // Predicated region
    $region30: #{tpu_custom_call.1} parent=1 // pred_check
      _
    $region31: #{tpu_custom_call.1} parent=1 // pred_check_branch
      %60 = sbr.rel (0) target = $region33
    $region32: #{tpu_custom_call.1} parent=1 // pred_region
      %61 = dma.done [#allocation7], 4096
    $region33: #{tpu_custom_call.1} parent=1 // pred_fallthru
      _
    %p62 = scmp.eq.s32.totalorder 0, 0
    // Predicated region
    $region34: #{tpu_custom_call.1} parent=1 // pred_check
      %p63 = pneg %p62
    $region35: #{tpu_custom_call.1} parent=1 // pred_check_branch
      %65 = sbr.rel (%p63) target = $region37
    $region36: #{tpu_custom_call.1} parent=1 // pred_region
      %66 = vst [vmem:[#allocation2] sm:$0xff] 0.0
      %67 = vst [vmem:[#allocation2 + $0x8] sm:$0xff] 0.0
    $region37: #{tpu_custom_call.1} parent=1 // pred_fallthru
      _
    %v68 = vld [vmem:[#allocation3] sm:$0xff]
    %v69 = vld [vmem:[#allocation3 + $0x8] sm:$0xff]
    %v70 = vld [vmem:[#allocation6] sm:$0xff]
    %v71 = vld [vmem:[#allocation6 + $0x8] sm:$0xff]
    %v72 = vld [vmem:[#allocation6 + $0x10] sm:$0xff]
    %v73 = vld [vmem:[#allocation6 + $0x18] sm:$0xff]
    %v74 = vld [vmem:[#allocation6 + $0x20] sm:$0xff]
    %v75 = vld [vmem:[#allocation6 + $0x28] sm:$0xff]
    %v76 = vld [vmem:[#allocation6 + $0x30] sm:$0xff]
    %v77 = vld [vmem:[#allocation6 + $0x38] sm:$0xff]
    %v78 = vld [vmem:[#allocation6 + $0x40] sm:$0xff]
    %v79 = vld [vmem:[#allocation6 + $0x48] sm:$0xff]
    %v80 = vld [vmem:[#allocation6 + $0x50] sm:$0xff]
    %v81 = vld [vmem:[#allocation6 + $0x58] sm:$0xff]
    %v82 = vld [vmem:[#allocation6 + $0x60] sm:$0xff]
    %v83 = vld [vmem:[#allocation6 + $0x68] sm:$0xff]
    %v84 = vld [vmem:[#allocation6 + $0x70] sm:$0xff]
    %v85 = vld [vmem:[#allocation6 + $0x78] sm:$0xff]
    %v86 = vld [vmem:[#allocation6 + $0x80] sm:$0xff]
    %v87 = vld [vmem:[#allocation6 + $0x88] sm:$0xff]
    %v88 = vld [vmem:[#allocation6 + $0x90] sm:$0xff]
    %v89 = vld [vmem:[#allocation6 + $0x98] sm:$0xff]
    %v90 = vld [vmem:[#allocation6 + $0xa0] sm:$0xff]
    %v91 = vld [vmem:[#allocation6 + $0xa8] sm:$0xff]
    %v92 = vld [vmem:[#allocation6 + $0xb0] sm:$0xff]
    %v93 = vld [vmem:[#allocation6 + $0xb8] sm:$0xff]
    %v94 = vld [vmem:[#allocation6 + $0xc0] sm:$0xff]
    %v95 = vld [vmem:[#allocation6 + $0xc8] sm:$0xff]
    %v96 = vld [vmem:[#allocation6 + $0xd0] sm:$0xff]
    %v97 = vld [vmem:[#allocation6 + $0xd8] sm:$0xff]
    %v98 = vld [vmem:[#allocation6 + $0xe0] sm:$0xff]
    %v99 = vld [vmem:[#allocation6 + $0xe8] sm:$0xff]
    %v100 = vld [vmem:[#allocation6 + $0xf0] sm:$0xff]
    %v101 = vld [vmem:[#allocation6 + $0xf8] sm:$0xff]
    %v102 = vld [vmem:[%s2] sm:$0x3]
    %v104 = vlaneseq
    %v105 = vshrl.u32 %v104, 7
    %v106 = vsub.s32 0, %v105
    %v107 = vrot.slane %v102, %v106
    %v108 = vlaneseq
    %v109 = vshrl.u32 %v108, 7
    %v110 = vsub.s32 1, %v109
    %v111 = vrot.slane %v102, %v110
    %114 = vmatprep.subr.mxu0 %v101
    %115 = vmatpush1.msra.mxu0 %v100
    %116 = vmatprep.subr.mxu0 %v99
    %117 = vmatpush1.msra.mxu0 %v98
    %118 = vmatprep.subr.mxu0 %v97
    %119 = vmatpush1.msra.mxu0 %v96
    %120 = vmatprep.subr.mxu0 %v95
    %121 = vmatpush1.msra.mxu0 %v94
    %122 = vmatprep.subr.mxu0 %v93
    %123 = vmatpush1.msra.mxu0 %v92
    %124 = vmatprep.subr.mxu0 %v91
    %125 = vmatpush1.msra.mxu0 %v90
    %126 = vmatprep.subr.mxu0 %v89
    %127 = vmatpush1.msra.mxu0 %v88
    %128 = vmatprep.subr.mxu0 %v87
    %129 = vmatpush1.msra.mxu0 %v86
    %130 = vmatprep.subr.mxu0 %v85
    %131 = vmatpush1.msra.mxu0 %v84
    %132 = vmatprep.subr.mxu0 %v83
    %133 = vmatpush1.msra.mxu0 %v82
    %134 = vmatprep.subr.mxu0 %v81
    %135 = vmatpush1.msra.mxu0 %v80
    %136 = vmatprep.subr.mxu0 %v79
    %137 = vmatpush1.msra.mxu0 %v78
    %138 = vmatprep.subr.mxu0 %v77
    %139 = vmatpush1.msra.mxu0 %v76
    %140 = vmatprep.subr.mxu0 %v75
    %141 = vmatpush1.msra.mxu0 %v74
    %142 = vmatprep.subr.mxu0 %v73
    %143 = vmatpush1.msra.mxu0 %v72
    %144 = vmatprep.subr.mxu0 %v71
    %145 = vmatpush1.msra.mxu0 %v70
    %146 = vmatprep.subr.mxu0 0.0
    %147 = vmatpush2.msra.mxu0 0.0
    %148 = vmatprep.subr.mxu0 0.0
    %149 = vmatpush2.msra.mxu0 0.0
    %150 = vmatprep.subr.mxu0 0.0
    %151 = vmatpush2.msra.mxu0 0.0
    %152 = vmatprep.subr.mxu0 0.0
    %153 = vmatpush2.msra.mxu0 0.0
    %154 = vmatprep.subr.mxu0 0.0
    %155 = vmatpush2.msra.mxu0 0.0
    %156 = vmatprep.subr.mxu0 0.0
    %157 = vmatpush2.msra.mxu0 0.0
    %158 = vmatprep.subr.mxu0 0.0
    %159 = vmatpush2.msra.mxu0 0.0
    %160 = vmatprep.subr.mxu0 0.0
    %161 = vmatpush2.msra.mxu0 0.0
    %162 = vmatprep.subr.mxu0 0.0
    %163 = vmatpush2.msra.mxu0 0.0
    %164 = vmatprep.subr.mxu0 0.0
    %165 = vmatpush2.msra.mxu0 0.0
    %166 = vmatprep.subr.mxu0 0.0
    %167 = vmatpush2.msra.mxu0 0.0
    %168 = vmatprep.subr.mxu0 0.0
    %169 = vmatpush2.msra.mxu0 0.0
    %170 = vmatprep.subr.mxu0 0.0
    %171 = vmatpush2.msra.mxu0 0.0
    %172 = vmatprep.subr.mxu0 0.0
    %173 = vmatpush2.msra.mxu0 0.0
    %174 = vmatprep.subr.mxu0 0.0
    %175 = vmatpush2.msra.mxu0 0.0
    %176 = vmatprep.subr.mxu0 0.0
    %177 = vmatpush2.msra.mxu0 0.0
    %178 = vmatprep.mubr.f32.mxu0 0.0
    %179 = vmatmul.mubr.f32.gmra.mxu0 %v68
    %v180 = vpop.f32.mrf.mxu0
    %v181 = vadd.f32 %v107, %v180
    %v182 = vpop.f32.mrf.mxu0
    %v183 = vadd.f32 %v111, %v182
    %184 = vmatprep.mubr.f32.mxu0 0.0
    %185 = vmatmul.mubr.f32.gmra.mxu0 %v69
    %v186 = vpop.f32.mrf.mxu0
    %v187 = vadd.f32 %v107, %v186
    %v188 = vpop.f32.mrf.mxu0
    %v189 = vadd.f32 %v111, %v188
    %190 = vdwg.mxu0
    %v191 = vmax.f32 %v181, 0.0
    %v192 = vmax.f32 %v183, 0.0
    %v193 = vmax.f32 %v187, 0.0
    %v194 = vmax.f32 %v189, 0.0
    %v195 = vld [vmem:[#allocation2] sm:$0xff]
    %v196 = vld [vmem:[#allocation2 + $0x8] sm:$0xff]
    %v197 = vld [vmem:[#allocation8] sm:$0xff]
    %v198 = vld [vmem:[#allocation8 + $0x8] sm:$0xff]
    %v199 = vld [vmem:[#allocation8 + $0x10] sm:$0xff]
    %v200 = vld [vmem:[#allocation8 + $0x18] sm:$0xff]
    %v201 = vld [vmem:[#allocation8 + $0x20] sm:$0xff]
    %v202 = vld [vmem:[#allocation8 + $0x28] sm:$0xff]
    %v203 = vld [vmem:[#allocation8 + $0x30] sm:$0xff]
    %v204 = vld [vmem:[#allocation8 + $0x38] sm:$0xff]
    %v205 = vld [vmem:[#allocation8 + $0x40] sm:$0xff]
    %v206 = vld [vmem:[#allocation8 + $0x48] sm:$0xff]
    %v207 = vld [vmem:[#allocation8 + $0x50] sm:$0xff]
    %v208 = vld [vmem:[#allocation8 + $0x58] sm:$0xff]
    %v209 = vld [vmem:[#allocation8 + $0x60] sm:$0xff]
    %v210 = vld [vmem:[#allocation8 + $0x68] sm:$0xff]
    %v211 = vld [vmem:[#allocation8 + $0x70] sm:$0xff]
    %v212 = vld [vmem:[#allocation8 + $0x78] sm:$0xff]
    %v213 = vld [vmem:[#allocation8 + $0x80] sm:$0xff]
    %v214 = vld [vmem:[#allocation8 + $0x88] sm:$0xff]
    %v215 = vld [vmem:[#allocation8 + $0x90] sm:$0xff]
    %v216 = vld [vmem:[#allocation8 + $0x98] sm:$0xff]
    %v217 = vld [vmem:[#allocation8 + $0xa0] sm:$0xff]
    %v218 = vld [vmem:[#allocation8 + $0xa8] sm:$0xff]
    %v219 = vld [vmem:[#allocation8 + $0xb0] sm:$0xff]
    %v220 = vld [vmem:[#allocation8 + $0xb8] sm:$0xff]
    %v221 = vld [vmem:[#allocation8 + $0xc0] sm:$0xff]
    %v222 = vld [vmem:[#allocation8 + $0xc8] sm:$0xff]
    %v223 = vld [vmem:[#allocation8 + $0xd0] sm:$0xff]
    %v224 = vld [vmem:[#allocation8 + $0xd8] sm:$0xff]
    %v225 = vld [vmem:[#allocation8 + $0xe0] sm:$0xff]
    %v226 = vld [vmem:[#allocation8 + $0xe8] sm:$0xff]
    %v227 = vld [vmem:[#allocation8 + $0xf0] sm:$0xff]
    %v228 = vld [vmem:[#allocation8 + $0xf8] sm:$0xff]
    %229 = vmatprep.subr.mxu0 0.0
    %230 = vmatpush1.msra.mxu0 %v212
    %231 = vmatprep.subr.mxu0 0.0
    %232 = vmatpush1.msra.mxu0 %v211
    %233 = vmatprep.subr.mxu0 0.0
    %234 = vmatpush1.msra.mxu0 %v210
    %235 = vmatprep.subr.mxu0 0.0
    %236 = vmatpush1.msra.mxu0 %v209
    %237 = vmatprep.subr.mxu0 0.0
    %238 = vmatpush1.msra.mxu0 %v208
    %239 = vmatprep.subr.mxu0 0.0
    %240 = vmatpush1.msra.mxu0 %v207
    %241 = vmatprep.subr.mxu0 0.0
    %242 = vmatpush1.msra.mxu0 %v206
    %243 = vmatprep.subr.mxu0 0.0
    %244 = vmatpush1.msra.mxu0 %v205
    %245 = vmatprep.subr.mxu0 0.0
    %246 = vmatpush1.msra.mxu0 %v204
    %247 = vmatprep.subr.mxu0 0.0
    %248 = vmatpush1.msra.mxu0 %v203
    %249 = vmatprep.subr.mxu0 0.0
    %250 = vmatpush1.msra.mxu0 %v202
    %251 = vmatprep.subr.mxu0 0.0
    %252 = vmatpush1.msra.mxu0 %v201
    %253 = vmatprep.subr.mxu0 0.0
    %254 = vmatpush1.msra.mxu0 %v200
    %255 = vmatprep.subr.mxu0 0.0
    %256 = vmatpush1.msra.mxu0 %v199
    %257 = vmatprep.subr.mxu0 0.0
    %258 = vmatpush1.msra.mxu0 %v198
    %259 = vmatprep.subr.mxu0 0.0
    %260 = vmatpush1.msra.mxu0 %v197
    %261 = vmatprep.subr.mxu0 0.0
    %262 = vmatpush2.msra.mxu0 %v228
    %263 = vmatprep.subr.mxu0 0.0
    %264 = vmatpush2.msra.mxu0 %v227
    %265 = vmatprep.subr.mxu0 0.0
    %266 = vmatpush2.msra.mxu0 %v226
    %267 = vmatprep.subr.mxu0 0.0
    %268 = vmatpush2.msra.mxu0 %v225
    %269 = vmatprep.subr.mxu0 0.0
    %270 = vmatpush2.msra.mxu0 %v224
    %271 = vmatprep.subr.mxu0 0.0
    %272 = vmatpush2.msra.mxu0 %v223
    %273 = vmatprep.subr.mxu0 0.0
    %274 = vmatpush2.msra.mxu0 %v222
    %275 = vmatprep.subr.mxu0 0.0
    %276 = vmatpush2.msra.mxu0 %v221
    %277 = vmatprep.subr.mxu0 0.0
    %278 = vmatpush2.msra.mxu0 %v220
    %279 = vmatprep.subr.mxu0 0.0
    %280 = vmatpush2.msra.mxu0 %v219
    %281 = vmatprep.subr.mxu0 0.0
    %282 = vmatpush2.msra.mxu0 %v218
    %283 = vmatprep.subr.mxu0 0.0
    %284 = vmatpush2.msra.mxu0 %v217
    %285 = vmatprep.subr.mxu0 0.0
    %286 = vmatpush2.msra.mxu0 %v216
    %287 = vmatprep.subr.mxu0 0.0
    %288 = vmatpush2.msra.mxu0 %v215
    %289 = vmatprep.subr.mxu0 0.0
    %290 = vmatpush2.msra.mxu0 %v214
    %291 = vmatprep.subr.mxu0 0.0
    %292 = vmatpush2.msra.mxu0 %v213
    %293 = vmatprep.mubr.f32.mxu0 %v192
    %294 = vmatmul.mubr.f32.gmra.mxu0 %v191
    %v295 = vpop.f32.mrf.mxu0
    %v296 = vadd.f32 0.0, %v295
    %v297 = vpop.f32.mrf.mxu0
    %298 = vmatprep.mubr.f32.mxu0 %v194
    %299 = vmatmul.mubr.f32.gmra.mxu0 %v193
    %v300 = vpop.f32.mrf.mxu0
    %v301 = vadd.f32 0.0, %v300
    %v302 = vpop.f32.mrf.mxu0
    %303 = vdwg.mxu0
    %v304 = vadd.f32 %v195, %v296
    %v305 = vadd.f32 %v196, %v301
    %306 = vst [vmem:[#allocation2] sm:$0xff] %v304
    %307 = vst [vmem:[#allocation2 + $0x8] sm:$0xff] %v305
    // Predicated region
    $region38: #{tpu_custom_call.1} parent=1 // pred_check
      %p308 = pneg %p62
    $region39: #{tpu_custom_call.1} parent=1 // pred_check_branch
      %310 = sbr.rel (%p308) target = $region41
    $region40: #{tpu_custom_call.1} parent=1 // pred_region
      %v311 = vld [vmem:[#allocation2] sm:$0xff]
      %v312 = vld [vmem:[#allocation2 + $0x8] sm:$0xff]
      %v313 = vld [vmem:[%s4] sm:$0x1]
      %v315 = vlaneseq
      %v316 = vshrl.u32 %v315, 7
      %v317 = vsub.s32 0, %v316
      %v318 = vrot.slane %v313, %v317
      %v320 = vadd.f32 %v311, %v318
      %v321 = vadd.f32 %v312, %v318
      %322 = vst [vmem:[#allocation9] sm:$0xff] %v320
      %323 = vst [vmem:[#allocation9 + $0x8] sm:$0xff] %v321
    $region41: #{tpu_custom_call.1} parent=1 // pred_fallthru
      _
    // Predicated region
    $region42: #{tpu_custom_call.1} parent=1 // pred_check
      _
    $region43: #{tpu_custom_call.1} parent=1 // pred_check_branch
      %325 = sbr.rel (0) target = $region45
    $region44: #{tpu_custom_call.1} parent=1 // pred_region
      %s327 = ssub.s32 256, 256
      %328 = vsyncadd [#allocation5], %s327
      %s329 = sshll.u32 [#allocation9], 4
      %s330 = int_to_ptr.vmem [resolvable:$true] %s329
      %335 = dma.vmem_to_hbm [thread:$0]  %s330, 256, %s5, [#allocation5], 128, 128, 8
    $region45: #{tpu_custom_call.1} parent=1 // pred_fallthru
      _
    // Predicated region
    $region46: #{tpu_custom_call.1} parent=1 // pred_check
      _
    $region47: #{tpu_custom_call.1} parent=1 // pred_check_branch
      %337 = sbr.rel (0) target = $region49
    $region48: #{tpu_custom_call.1} parent=1 // pred_region
      %338 = dma.done [#allocation5], 256
    $region49: #{tpu_custom_call.1} parent=1 // pred_fallthru
      _
    %339 = vsyncpa [#allocation4], 1
    %340 = vsyncpa [#allocation7], 1
    %341 = vsyncpa [#allocation5], 1

</llo_original>
